<compile_context>
chip_gen: v7x
topology: tpu7x:2x2x1
jax: 0.10.0
libtpu: 0.0.40
codegen_flags: <defaults>
</compile_context>

<pallas_src>
import functools

import jax
import jax.numpy as jnp
from jax import lax
from jax.experimental import pallas as pl
from jax.experimental.pallas import tpu as pltpu


def _round_up(x: int, m: int) -> int:
    return (x + m - 1) // m * m


def _prefer_native_bf16_compute() -> bool:
    """True on chips whose VPU has native bf16 (v6e / v7x); False otherwise."""
    try:
        kind = jax.devices()[0].device_kind.lower()
    except Exception:
        return False
    for old in ("v2", "v3", "v4", "v5"):
        if old in kind:
            return False
    return True


def _ce_tile_kernel(labels_ref, logits_ref, out_ref, acc_ref, *,
                    true_n, upcast_early):
    """Accumulates the sum of per-row NLL for one (TILE_N, C) logits tile.

    Grid: (cdiv(N, TILE_N),) -- single serial accumulation axis.

    labels_ref: (TILE_N, 1) int32 in VMEM (ragged-tail rows hold garbage)
    logits_ref: (TILE_N, C) in the caller's dtype (bf16/f16/f32)
    out_ref:    (8, 128) f32 resident block, written once at the last step
    acc_ref:    (1, 1) f32 VMEM scratch (running NLL sum)
    true_n:     static int, number of valid rows in the whole input
    upcast_early: static bool, cast logits to f32 before the shift/select
    """
    i = pl.program_id(0)

    @pl.when(i == 0)
    def _():
        acc_ref[...] = jnp.zeros_like(acc_ref)

    x = logits_ref[...]                                            # (TILE_N, C)
    if upcast_early or x.dtype == jnp.float32:
        x = x.astype(jnp.float32)
    tn, c = x.shape

    # Validity mask for the ragged last tile (no wrapper-side padding of the
    # logits).  Garbage rows must be zeroed BEFORE the exp.
    row_ids = i * tn + lax.broadcasted_iota(jnp.int32, (tn, 1), 0)
    valid = row_ids < true_n                                       # (TILE_N, 1)

    # Numerically-stable log-sum-exp pieces, expressed on `shifted` so the raw
    # logits go dead immediately (shorter vreg live range on wide-C tiles).
    row_max = jnp.max(x, axis=-1, keepdims=True)                   # (TILE_N, 1)
    shifted = jnp.where(valid, x - row_max, jnp.zeros_like(x))     # (TILE_N, C)

    # Target logit via one-hot select (no dynamic gather on TPU).  The row_max
    # term cancels between log-sum-exp and the picked logit, so use `shifted`.
    col_ids = lax.broadcasted_iota(jnp.int32, (tn, c), 1)
    labels = labels_ref[...]                                       # (TILE_N, 1)
    picked = jnp.sum(
        jnp.where(col_ids == labels, shifted, jnp.zeros_like(shifted)),
        axis=-1, keepdims=True).astype(jnp.float32)                # (TILE_N, 1)

    # exp / log / accumulation always in f32.
    # TODO(synk): on v7x, offload these lane reductions to the idle MXU
    # (dot with a ones reducer) if profiling shows the XLU/VALU slot binds.
    sum_exp = jnp.sum(jnp.exp(shifted.astype(jnp.float32)),
                      axis=-1, keepdims=True)                      # (TILE_N, 1)
    nll = jnp.log(sum_exp) - picked                                # (TILE_N, 1)
    acc_ref[...] = acc_ref[...] + jnp.sum(nll * valid.astype(jnp.float32))

    # Emit the partial sum once, at the last serial step, into a lane-dense
    # (8,128) block (no per-step masked scalar stores).
    @pl.when(i == pl.num_programs(0) - 1)
    def _():
        out_ref[...] = jnp.broadcast_to(acc_ref[...], out_ref.shape)


def custom_mse_loss(y_pred, y_true, rotation_loss=None, reduction="mean",
                    tile_n=None, interpret=False):
    """Pallas equivalent of CustomMSELoss.forward.

    y_pred: (N, C) logits, any float dtype (DMA'd at native width)
    y_true: (N,)  integer class indices
    rotation_loss: unused (matches the reference forward)
    """
    del rotation_loss  # unused by the reference forward
    n, c = y_pred.shape
    itemsize = jnp.dtype(y_pred.dtype).itemsize
    # Packed-dtype sublane multiple for the second-minor block dim.
    sub = {1: 32, 2: 16}.get(itemsize, 8)

    # Per-generation VMEM capacity (v5e/v6e: 128 MiB, v7x: 64 MiB per TC).
    try:
        vmem_cap = int(pltpu.get_tpu_info().vmem_capacity_bytes)
    except Exception:
        vmem_cap = 64 << 20  # conservative fallback: safe on every generation

    # Bytes kept live in VMEM per logits row: two pipeline copies of the block
    # plus ~4 f32-wide elementwise intermediates materialized by Mosaic.
    bytes_per_row = c * (2 * itemsize + 4 * 4)
    vmem_budget = min(vmem_cap // 2, 48 << 20)

    if tile_n is None:
        tile_n = max(sub, (vmem_budget // bytes_per_row) // sub * sub)
    tile_n = max(sub, _round_up(int(tile_n), sub))
    tile_n = min(tile_n, _round_up(n, sub))
    num_tiles = (n + tile_n - 1) // tile_n

    # Explicit scoped-VMEM limit: above v5e's 16 MiB default, below v7x's
    # 64 MiB physical, with headroom over the working set.
    vmem_limit = int(min(vmem_cap - (2 << 20),
                         max(vmem_budget + (8 << 20), 32 << 20)))

    # Only the tiny labels array gets reshaped; logits are streamed untouched
    # (no jnp.pad -> no extra full HBM read+write of the logits).
    labels = y_true.astype(jnp.int32).reshape(n, 1)
    logits = y_pred  # native dtype across the HBM->VMEM DMA

    upcast_early = not (y_pred.dtype == jnp.bfloat16
                        and _prefer_native_bf16_compute())

    cost = pl.CostEstimate(
        flops=6 * n * c,
        transcendentals=n * c + n,
        bytes_accessed=n * c * itemsize + n * 4 + 8 * 128 * 4,
    )

    partials = pl.pallas_call(
        functools.partial(_ce_tile_kernel, true_n=n, upcast_early=upcast_early),
        out_shape=jax.ShapeDtypeStruct((8, 128), jnp.float32),
        grid_spec=pltpu.PrefetchScalarGridSpec(
            num_scalar_prefetch=0,
            grid=(num_tiles,),
            in_specs=[
                pl.BlockSpec((tile_n, 1), lambda i: (i, 0)),
                pl.BlockSpec((tile_n, c), lambda i: (i, 0)),
            ],
            out_specs=pl.BlockSpec((8, 128), lambda i: (0, 0)),
            scratch_shapes=[pltpu.VMEM((1, 1), jnp.float32)],
        ),
        compiler_params=pltpu.CompilerParams(
            dimension_semantics=("arbitrary",),
            vmem_limit_bytes=vmem_limit,
        ),
        cost_estimate=cost,
        interpret=interpret,
    )(labels, logits)

    # Mean over the true N (multiply by a precomputed reciprocal, no divide).
    loss = partials[0, 0] * jnp.float32(1.0 / n)

    # nn.CrossEntropyLoss() already mean-reduces to a scalar, so the reference
    # module's .mean()/.sum() branches all return the same scalar value.
    del reduction
    return loss


if __name__ == "__main__":
    key = jax.random.PRNGKey(0)
    k1, k2 = jax.random.split(key)

    # Deliberately not a multiple of the tile so the ragged-tail masking path
    # runs (44 rows with tile_n=16 -> grid of 3 tiles, last tile 4 rows OOB).
    N, C = 44, 32
    y_pred = jax.random.normal(k1, (N, C), dtype=jnp.float32)
    y_true = jax.random.randint(k2, (N,), 0, C, dtype=jnp.int32)
    rotation_loss = jnp.float32(0.0)  # ignored, as in the reference module

    def ref_ce(logits, labels):
        logits = logits.astype(jnp.float32)
        lse = jax.scipy.special.logsumexp(logits, axis=-1)
        picked = jnp.take_along_axis(logits, labels[:, None], axis=-1)[:, 0]
        return jnp.mean(lse - picked)

    ref = ref_ce(y_pred, y_true)

    # Auto tile size (single block for this small shape).
    loss = custom_mse_loss(y_pred, y_true, rotation_loss)
    # Forced small tile: exercises the multi-step grid + ragged-tail mask.
    loss_small = custom_mse_loss(y_pred, y_true, rotation_loss, tile_n=16)
    jax.block_until_ready((loss, loss_small))
    assert jnp.allclose(loss, ref, atol=1e-5, rtol=1e-5), (loss, ref)
    assert jnp.allclose(loss_small, ref, atol=1e-5, rtol=1e-5), (loss_small, ref)

    # bf16 logits stay bf16 across the HBM->VMEM DMA; on v6e/v7x the
    # shift/select also stays bf16 (f32 on v5e).
    y_pred_bf16 = y_pred.astype(jnp.bfloat16)
    loss_bf16 = custom_mse_loss(y_pred_bf16, y_true, rotation_loss, tile_n=16)
    jax.block_until_ready(loss_bf16)
    ref_bf16 = ref_ce(y_pred_bf16, y_true)
    assert jnp.allclose(loss_bf16, ref_bf16, atol=2e-2, rtol=2e-2), (
        loss_bf16, ref_bf16)

    print("KERNEL_OK")
</pallas_src>

<mosaic_0001>
module attributes {stable_mosaic.version = 11 : i64} {
  func.func @_ce_tile_kernel(%arg0: i32, %arg1: memref<48x1xi32, #tpu.memory_space<vmem>>, %arg2: memref<48x32xf32, #tpu.memory_space<vmem>>, %arg3: memref<8x128xf32, #tpu.memory_space<vmem>>, %arg4: memref<1x1xf32, #tpu.memory_space<vmem>>) attributes {dimension_semantics = [#tpu.dimension_semantics<arbitrary>], iteration_bounds = array<i64: 1>, scalar_prefetch = 0 : i64, scratch_operands = 1 : i64, tpu.core_type = #tpu.core_type<tc>, window_params = [{transform_indices = @transform_0, window_bounds = array<i64: 48, 1>}, {transform_indices = @transform_1, window_bounds = array<i64: 48, 32>}, {pipeline_mode = #tpu.pipeline_mode<synchronous>, transform_indices = @transform_2, window_bounds = array<i64: 8, 128>}]} {
    %c0_i32 = arith.constant 0 : i32
    %0 = arith.cmpi eq, %arg0, %c0_i32 : i32
    %1 = arith.extui %0 : i1 to i32
    %c0_i32_0 = arith.constant 0 : i32
    %2 = arith.cmpi ne, %1, %c0_i32_0 : i32
    scf.if %2 {
      %cst_15 = arith.constant 0.000000e+00 : f32
      %45 = vector.broadcast %cst_15 : f32 to vector<1x1xf32>
      %c0_16 = arith.constant 0 : index
      %c0_17 = arith.constant 0 : index
      %46 = vector.load %arg4[%c0_16, %c0_17] : memref<1x1xf32, #tpu.memory_space<vmem>>, vector<1x1xf32>
      tpu.vector_store %arg4[%c0_16, %c0_17], %45 {strides = array<i32>} : memref<1x1xf32, #tpu.memory_space<vmem>>, vector<1x1xf32>,
    } else {
    }
    %c0 = arith.constant 0 : index
    %c0_1 = arith.constant 0 : index
    %3 = vector.load %arg2[%c0, %c0_1] : memref<48x32xf32, #tpu.memory_space<vmem>>, vector<48x32xf32>
    %c48_i32 = arith.constant 48 : i32
    %4 = arith.muli %arg0, %c48_i32 : i32
    %5 = tpu.iota {dimensions = array<i32: 0>} : vector<48x1xi32>
    %6 = vector.broadcast %4 : i32 to vector<48x1xi32>
    %7 = arith.addi %6, %5 : vector<48x1xi32>
    %c44_i32 = arith.constant 44 : i32
    %8 = vector.broadcast %c44_i32 : i32 to vector<48x1xi32>
    %9 = arith.cmpi slt, %7, %8 : vector<48x1xi32>
    %cst = arith.constant dense<0xFF800000> : vector<48xf32>
    %10 = vector.multi_reduction <maximumf>, %3, %cst [1] : vector<48x32xf32> to vector<48xf32>
    %11 = vector.shape_cast %10 : vector<48xf32> to vector<48x1xf32>
    %12 = vector.broadcast %11 : vector<48x1xf32> to vector<48x32xf32>
    %13 = arith.subf %3, %12 : vector<48x32xf32>
    %cst_2 = arith.constant 0.000000e+00 : f32
    %14 = vector.broadcast %cst_2 : f32 to vector<48x32xf32>
    %15 = vector.shape_cast %9 : vector<48x1xi1> to vector<48x1xi1>
    %16 = vector.broadcast %15 : vector<48x1xi1> to vector<48x32xi1>
    %17 = arith.select %16, %13, %14 : vector<48x32xi1>, vector<48x32xf32>
    %18 = tpu.iota {dimensions = array<i32: 1>} : vector<48x32xi32>
    %c0_3 = arith.constant 0 : index
    %c0_4 = arith.constant 0 : index
    %19 = vector.load %arg1[%c0_3, %c0_4] : memref<48x1xi32, #tpu.memory_space<vmem>>, vector<48x1xi32>
    %20 = vector.broadcast %19 : vector<48x1xi32> to vector<48x32xi32>
    %21 = arith.cmpi eq, %18, %20 : vector<48x32xi32>
    %cst_5 = arith.constant 0.000000e+00 : f32
    %22 = vector.broadcast %cst_5 : f32 to vector<48x32xf32>
    %23 = arith.select %21, %17, %22 : vector<48x32xi1>, vector<48x32xf32>
    %cst_6 = arith.constant dense<0.000000e+00> : vector<48xf32>
    %24 = vector.multi_reduction <add>, %23, %cst_6 [1] : vector<48x32xf32> to vector<48xf32>
    %25 = vector.shape_cast %24 : vector<48xf32> to vector<48x1xf32>
    %26 = math.exp %17 : vector<48x32xf32>
    %cst_7 = arith.constant dense<0.000000e+00> : vector<48xf32>
    %27 = vector.multi_reduction <add>, %26, %cst_7 [1] : vector<48x32xf32> to vector<48xf32>
    %28 = vector.shape_cast %27 : vector<48xf32> to vector<48x1xf32>
    %29 = math.log %28 : vector<48x1xf32>
    %30 = arith.subf %29, %25 : vector<48x1xf32>
    %c0_8 = arith.constant 0 : index
    %c0_9 = arith.constant 0 : index
    %31 = vector.load %arg4[%c0_8, %c0_9] : memref<1x1xf32, #tpu.memory_space<vmem>>, vector<1x1xf32>
    %32 = arith.extui %9 : vector<48x1xi1> to vector<48x1xi32>
    %33 = arith.sitofp %32 : vector<48x1xi32> to vector<48x1xf32>
    %34 = arith.mulf %30, %33 : vector<48x1xf32>
    %35 = vector.shape_cast %34 : vector<48x1xf32> to vector<1x48x1xf32>
    %cst_10 = arith.constant dense<0.000000e+00> : vector<1xf32>
    %36 = vector.multi_reduction <add>, %35, %cst_10 [1, 2] : vector<1x48x1xf32> to vector<1xf32>
    %37 = vector.shape_cast %36 : vector<1xf32> to vector<1x1x1xf32>
    %38 = vector.extract %37[0, 0, 0] : f32 from vector<1x1x1xf32>
    %39 = vector.broadcast %38 : f32 to vector<1x1xf32>
    %40 = arith.addf %31, %39 : vector<1x1xf32>
    %c0_11 = arith.constant 0 : index
    %c0_12 = arith.constant 0 : index
    %41 = vector.load %arg4[%c0_11, %c0_12] : memref<1x1xf32, #tpu.memory_space<vmem>>, vector<1x1xf32>
    tpu.vector_store %arg4[%c0_11, %c0_12], %40 {strides = array<i32>} : memref<1x1xf32, #tpu.memory_space<vmem>>, vector<1x1xf32>,
    %c0_i32_13 = arith.constant 0 : i32
    %42 = arith.cmpi eq, %arg0, %c0_i32_13 : i32
    %43 = arith.extui %42 : i1 to i32
    %c0_i32_14 = arith.constant 0 : i32
    %44 = arith.cmpi ne, %43, %c0_i32_14 : i32
    scf.if %44 {
      %c0_15 = arith.constant 0 : index
      %c0_16 = arith.constant 0 : index
      %45 = vector.load %arg4[%c0_15, %c0_16] : memref<1x1xf32, #tpu.memory_space<vmem>>, vector<1x1xf32>
      %46 = vector.shape_cast %45 : vector<1x1xf32> to vector<1x1xf32>
      %47 = vector.broadcast %46 : vector<1x1xf32> to vector<8x128xf32>
      %c0_17 = arith.constant 0 : index
      %c0_18 = arith.constant 0 : index
      %48 = vector.load %arg3[%c0_17, %c0_18] : memref<8x128xf32, #tpu.memory_space<vmem>>, vector<8x128xf32>
      tpu.vector_store %arg3[%c0_17, %c0_18], %47 {strides = array<i32>} : memref<8x128xf32, #tpu.memory_space<vmem>>, vector<8x128xf32>,
    } else {
    }
    return
  }
  func.func @transform_0(%arg0: i32) -> (i32, i32) {
    %c0_i32 = arith.constant 0 : i32
    %c0_i32_0 = arith.constant 0 : i32
    return %arg0, %c0_i32 : i32, i32
  }
  func.func @transform_1(%arg0: i32) -> (i32, i32) {
    %c0_i32 = arith.constant 0 : i32
    %c0_i32_0 = arith.constant 0 : i32
    return %arg0, %c0_i32 : i32, i32
  }
  func.func @transform_2(%arg0: i32) -> (i32, i32) {
    %c0_i32 = arith.constant 0 : i32
    %c0_i32_0 = arith.constant 0 : i32
    %c0_i32_1 = arith.constant 0 : i32
    return %c0_i32, %c0_i32_0 : i32, i32
  }
}

</mosaic_0001>

<llo_original>
// kernel: tpu_custom_call.1
$region0: #{tpu_custom_call.1}
  #allocation0 [shape = 'u32[]', space=smem, size = 0x4, offset = 0x4, fixed_abs, tag = 'smem constant byte address 0x4 - core index']
  #allocation1 [shape = 'u32[144,128]{1,0:T(1,128)}', space=vmem, size = 0x12000, scoped, tag = 'internal scratch']
  #allocation2 [shape = 'f32[1,1]{1,0:T(1,128)}', space=vmem, size = 0x200, scoped, tag = 'scratch operand']
  %s0 = inlined_call_operand.vmem [shape: s32[44,1], index: 0, kind: input, shape index: {}]
  %s1 = inlined_call_operand.vmem [shape: f32[44,32], index: 1, kind: input, shape index: {}]
  %s2 = inlined_call_operand.hbm [shape: f32[8,128], index: 2, kind: output, shape index: {}]
  %s3 = sld [smem:[#allocation0]]
  $region26: #{tpu_custom_call.1} parent=0
    _
  %s5 = ssub.s32 1, %s3
  %s6 = scalar_select 0, %s5, %s3
  $region1: #{tpu_custom_call.1} parent=0
    #allocation3 [shape = 'u8[4096]{0}', space=vmem, size = 0x1000, scoped, tag = 'output window, operand 0, single buffered']
    #allocation4 [shape = 's32[1]{0}', space=sflag, size = 0x4, scoped, tag = 'scoped memory for tpu_custom_call.1']
    %7 = vsyncpa [#allocation4], 0
    // Predicated region
    $region2: #{tpu_custom_call.1} parent=1 // pred_check
      _
    $region3: #{tpu_custom_call.1} parent=1 // pred_check_branch
      %9 = sbr.rel (0) target = $region5
    $region4: #{tpu_custom_call.1} parent=1 // pred_region
      _
    $region5: #{tpu_custom_call.1} parent=1 // pred_fallthru
      _
    // Predicated region
    $region6: #{tpu_custom_call.1} parent=1 // pred_check
      _
    $region7: #{tpu_custom_call.1} parent=1 // pred_check_branch
      %11 = sbr.rel (0) target = $region9
    $region8: #{tpu_custom_call.1} parent=1 // pred_region
      _
    $region9: #{tpu_custom_call.1} parent=1 // pred_fallthru
      _
    %p12 = scmp.eq.s32.totalorder 0, 0
    // Predicated region
    $region10: #{tpu_custom_call.1} parent=1 // pred_check
      %p13 = pneg %p12
    $region11: #{tpu_custom_call.1} parent=1 // pred_check_branch
      %15 = sbr.rel (%p13) target = $region13
    $region12: #{tpu_custom_call.1} parent=1 // pred_region
      %vm16 = vcmask 0
      %17 = vst.msk [vmem:[#allocation2] sm:$0x1] %vm16, 0.0
    $region13: #{tpu_custom_call.1} parent=1 // pred_fallthru
      _
    %v18 = vld [vmem:[%s1] sm:$0xff]
    %v19 = vld [vmem:[%s1 + $0x8] sm:$0xff]
    %v20 = vld [vmem:[%s1 + $0x10] sm:$0xff]
    %v21 = vld [vmem:[%s1 + $0x18] sm:$0xff]
    %v22 = vld [vmem:[%s1 + $0x20] sm:$0xff]
    %v23 = vld [vmem:[%s1 + $0x28] sm:$0xff]
    %s24 = smul.u32 0, 48
    %v25 = vlaneseq
    %v26 = vshrl.u32 %v25, 7
    %v27 = vadd.s32 %v26, 8
    %v28 = vadd.s32 %v26, 16
    %v29 = vadd.s32 %v26, 24
    %v30 = vadd.s32 %v26, 32
    %v31 = vadd.s32 %v26, 40
    %v32 = vstv %s24
    %v33 = vadd.s32 %v32, %v26
    %v34 = vadd.s32 %v32, %v27
    %v35 = vadd.s32 %v32, %v28
    %v36 = vadd.s32 %v32, %v29
    %v37 = vadd.s32 %v32, %v30
    %v38 = vadd.s32 %v32, %v31
    %vm39 = vcmp.lt.s32.totalorder %v33, 44
    %vm40 = vcmp.lt.s32.totalorder %v34, 44
    %vm41 = vcmp.lt.s32.totalorder %v35, 44
    %vm42 = vcmp.lt.s32.totalorder %v36, 44
    %vm43 = vcmp.lt.s32.totalorder %v37, 44
    %vm44 = vcmp.lt.s32.totalorder %v38, 44
    %vm45 = vcmask 261120
    %v46 = vsel %vm45, %v18, -inf
    %47 = vmax.xlane.f32.xlu0 %v46
    %v48 = vpop.xlane.xlu0 %47
    %v49 = vsel %vm45, %v19, -inf
    %50 = vmax.xlane.f32.xlu0 %v49
    %v51 = vpop.xlane.xlu0 %50
    %v52 = vsel %vm45, %v20, -inf
    %53 = vmax.xlane.f32.xlu0 %v52
    %v54 = vpop.xlane.xlu0 %53
    %v55 = vsel %vm45, %v21, -inf
    %56 = vmax.xlane.f32.xlu0 %v55
    %v57 = vpop.xlane.xlu0 %56
    %v58 = vsel %vm45, %v22, -inf
    %59 = vmax.xlane.f32.xlu0 %v58
    %v60 = vpop.xlane.xlu0 %59
    %v61 = vsel %vm45, %v23, -inf
    %62 = vmax.xlane.f32.xlu0 %v61
    %v63 = vpop.xlane.xlu0 %62
    %v64 = vsub.f32 %v18, %v48
    %v65 = vsub.f32 %v19, %v51
    %v66 = vsub.f32 %v20, %v54
    %v67 = vsub.f32 %v21, %v57
    %v68 = vsub.f32 %v22, %v60
    %v69 = vsub.f32 %v23, %v63
    %v70 = vsel %vm39, 1, 0
    %v71 = vsel %vm40, 1, 0
    %v72 = vsel %vm41, 1, 0
    %v73 = vsel %vm42, 1, 0
    %v74 = vsel %vm43, 1, 0
    %v75 = vsel %vm44, 1, 0
    %vm76 = vcmp.eq.s32.totalorder %v70, 1
    %vm77 = vcmp.eq.s32.totalorder %v71, 1
    %vm78 = vcmp.eq.s32.totalorder %v72, 1
    %vm79 = vcmp.eq.s32.totalorder %v73, 1
    %vm80 = vcmp.eq.s32.totalorder %v74, 1
    %vm81 = vcmp.eq.s32.totalorder %v75, 1
    %v82 = vsel %vm76, %v64, 0.0
    %v83 = vsel %vm77, %v65, 0.0
    %v84 = vsel %vm78, %v66, 0.0
    %v85 = vsel %vm79, %v67, 0.0
    %v86 = vsel %vm80, %v68, 0.0
    %v87 = vsel %vm81, %v69, 0.0
    %v88 = vlaneseq
    %v89 = vand.u32 %v88, 127
    %v90 = vld [vmem:[%s0] sm:$0xff]
    %v91 = vld [vmem:[%s0 + $0x8] sm:$0xff]
    %v92 = vld [vmem:[%s0 + $0x10] sm:$0xff]
    %v93 = vld [vmem:[%s0 + $0x18] sm:$0xff]
    %v94 = vld [vmem:[%s0 + $0x20] sm:$0xff]
    %v95 = vld [vmem:[%s0 + $0x28] sm:$0xff]
    %96 = vset.pattern.permute.xlu0 0
    %97 = vperm.xlu0 %96, %v90
    %v98 = vpop.permute.xlu0 %97
    %99 = vset.pattern.permute.xlu0 0
    %100 = vperm.xlu0 %99, %v91
    %v101 = vpop.permute.xlu0 %100
    %102 = vset.pattern.permute.xlu0 0
    %103 = vperm.xlu0 %102, %v92
    %v104 = vpop.permute.xlu0 %103
    %105 = vset.pattern.permute.xlu0 0
    %106 = vperm.xlu0 %105, %v93
    %v107 = vpop.permute.xlu0 %106
    %108 = vset.pattern.permute.xlu0 0
    %109 = vperm.xlu0 %108, %v94
    %v110 = vpop.permute.xlu0 %109
    %111 = vset.pattern.permute.xlu0 0
    %112 = vperm.xlu0 %111, %v95
    %v113 = vpop.permute.xlu0 %112
    %vm114 = vcmp.eq.s32.totalorder %v89, %v98
    %vm115 = vcmp.eq.s32.totalorder %v89, %v101
    %vm116 = vcmp.eq.s32.totalorder %v89, %v104
    %vm117 = vcmp.eq.s32.totalorder %v89, %v107
    %vm118 = vcmp.eq.s32.totalorder %v89, %v110
    %vm119 = vcmp.eq.s32.totalorder %v89, %v113
    %v120 = vsel %vm114, %v82, 0.0
    %v121 = vsel %vm115, %v83, 0.0
    %v122 = vsel %vm116, %v84, 0.0
    %v123 = vsel %vm117, %v85, 0.0
    %v124 = vsel %vm118, %v86, 0.0
    %v125 = vsel %vm119, %v87, 0.0
    %v126 = vsel %vm45, %v120, 0.0
    %127 = vadd.xlane.f32.xlu0 %v126
    %v128 = vpop.xlane.xlu0 %127
    %v129 = vsel %vm45, %v121, 0.0
    %130 = vadd.xlane.f32.xlu0 %v129
    %v131 = vpop.xlane.xlu0 %130
    %v132 = vsel %vm45, %v122, 0.0
    %133 = vadd.xlane.f32.xlu0 %v132
    %v134 = vpop.xlane.xlu0 %133
    %v135 = vsel %vm45, %v123, 0.0
    %136 = vadd.xlane.f32.xlu0 %v135
    %v137 = vpop.xlane.xlu0 %136
    %v138 = vsel %vm45, %v124, 0.0
    %139 = vadd.xlane.f32.xlu0 %v138
    %v140 = vpop.xlane.xlu0 %139
    %v141 = vsel %vm45, %v125, 0.0
    %142 = vadd.xlane.f32.xlu0 %v141
    %v143 = vpop.xlane.xlu0 %142
    %v144 = vmul.f32 %v82, 1.442695
    %v145 = vpow.pop %v144
    %v146 = vmul.f32 %v83, 1.442695
    %v147 = vpow.pop %v146
    %v148 = vmul.f32 %v84, 1.442695
    %v149 = vpow.pop %v148
    %v150 = vmul.f32 %v85, 1.442695
    %v151 = vpow.pop %v150
    %v152 = vmul.f32 %v86, 1.442695
    %v153 = vpow.pop %v152
    %v154 = vmul.f32 %v87, 1.442695
    %v155 = vpow.pop %v154
    %v156 = vsel %vm45, %v145, 0.0
    %157 = vadd.xlane.f32.xlu0 %v156
    %v158 = vpop.xlane.xlu0 %157
    %v159 = vsel %vm45, %v147, 0.0
    %160 = vadd.xlane.f32.xlu0 %v159
    %v161 = vpop.xlane.xlu0 %160
    %v162 = vsel %vm45, %v149, 0.0
    %163 = vadd.xlane.f32.xlu0 %v162
    %v164 = vpop.xlane.xlu0 %163
    %v165 = vsel %vm45, %v151, 0.0
    %166 = vadd.xlane.f32.xlu0 %v165
    %v167 = vpop.xlane.xlu0 %166
    %v168 = vsel %vm45, %v153, 0.0
    %169 = vadd.xlane.f32.xlu0 %v168
    %v170 = vpop.xlane.xlu0 %169
    %v171 = vsel %vm45, %v155, 0.0
    %172 = vadd.xlane.f32.xlu0 %v171
    %v173 = vpop.xlane.xlu0 %172
    %v174 = vlog2.pop %v158
    %v175 = vmul.f32 %v174, 0.6931472
    %v176 = vlog2.pop %v161
    %v177 = vmul.f32 %v176, 0.6931472
    %v178 = vlog2.pop %v164
    %v179 = vmul.f32 %v178, 0.6931472
    %v180 = vlog2.pop %v167
    %v181 = vmul.f32 %v180, 0.6931472
    %v182 = vlog2.pop %v170
    %v183 = vmul.f32 %v182, 0.6931472
    %v184 = vlog2.pop %v173
    %v185 = vmul.f32 %v184, 0.6931472
    %v186 = vsub.f32 %v175, %v128
    %v187 = vsub.f32 %v177, %v131
    %v188 = vsub.f32 %v179, %v134
    %v189 = vsub.f32 %v181, %v137
    %v190 = vsub.f32 %v183, %v140
    %v191 = vsub.f32 %v185, %v143
    %v192 = vld [vmem:[#allocation2] sm:$0x1]
    %v193 = vcvt.s32.f32 %v70
    %v194 = vcvt.s32.f32 %v71
    %v195 = vcvt.s32.f32 %v72
    %v196 = vcvt.s32.f32 %v73
    %v197 = vcvt.s32.f32 %v74
    %v198 = vcvt.s32.f32 %v75
    %v199 = vmul.f32 %v186, %v193
    %v200 = vmul.f32 %v187, %v194
    %v201 = vmul.f32 %v188, %v195
    %v202 = vmul.f32 %v189, %v196
    %v203 = vmul.f32 %v190, %v197
    %v204 = vmul.f32 %v191, %v198
    %vm205 = vcmask 7168
    %v206 = vsel %vm205, %v199, 0.0
    %v207 = vsel %vm205, %v200, 0.0
    %v208 = vadd.f32 %v206, %v207
    %v209 = vsel %vm205, %v201, 0.0
    %v210 = vadd.f32 %v208, %v209
    %v211 = vsel %vm205, %v202, 0.0
    %v212 = vadd.f32 %v210, %v211
    %v213 = vsel %vm205, %v203, 0.0
    %v214 = vadd.f32 %v212, %v213
    %v215 = vsel %vm205, %v204, 0.0
    %v216 = vadd.f32 %v214, %v215
    %217 = vadd.xlane.f32.xlu0 %v216
    %v218 = vpop.xlane.xlu0 %217
    %v219 = vrot.slane %v218, 4
    %v220 = vadd.f32 %v218, %v219
    %v221 = vrot.slane %v220, 2
    %v222 = vadd.f32 %v220, %v221
    %v223 = vrot.slane %v222, 1
    %v224 = vadd.f32 %v222, %v223
    %s225 = vtos %v224
    %v226 = vstv %s225
    %v227 = vadd.f32 %v192, %v226
    %vm228 = vcmask 0
    %229 = vst.msk [vmem:[#allocation2] sm:$0x1] %vm228, %v227
    // Predicated region
    $region14: #{tpu_custom_call.1} parent=1 // pred_check
      %p230 = pneg %p12
    $region15: #{tpu_custom_call.1} parent=1 // pred_check_branch
      %232 = sbr.rel (%p230) target = $region17
    $region16: #{tpu_custom_call.1} parent=1 // pred_region
      %v233 = vld [vmem:[#allocation2] sm:$0x1]
      %v235 = vlaneseq
      %v236 = vshrl.u32 %v235, 7
      %v237 = vsub.s32 0, %v236
      %v238 = vrot.slane %v233, %v237
      %239 = vset.pattern.permute.xlu0 0
      %240 = vperm.xlu0 %239, %v238
      %v241 = vpop.permute.xlu0 %240
      %243 = vst [vmem:[#allocation3] sm:$0xff] %v241
    $region17: #{tpu_custom_call.1} parent=1 // pred_fallthru
      _
    // Predicated region
    $region18: #{tpu_custom_call.1} parent=1 // pred_check
      _
    $region19: #{tpu_custom_call.1} parent=1 // pred_check_branch
      %245 = sbr.rel (0) target = $region21
    $region20: #{tpu_custom_call.1} parent=1 // pred_region
      %s247 = ssub.s32 128, 128
      %248 = vsyncadd [#allocation4], %s247
      %s250 = sshll.u32 [#allocation3], 4
      %s251 = int_to_ptr.vmem [resolvable:$true] %s250
      %253 = dma.vmem_to_hbm [thread:$0]  %s251, 128, %s2, [#allocation4]
    $region21: #{tpu_custom_call.1} parent=1 // pred_fallthru
      _
    // Predicated region
    $region22: #{tpu_custom_call.1} parent=1 // pred_check
      _
    $region23: #{tpu_custom_call.1} parent=1 // pred_check_branch
      %255 = sbr.rel (0) target = $region25
    $region24: #{tpu_custom_call.1} parent=1 // pred_region
      %256 = dma.done [#allocation4], 128
    $region25: #{tpu_custom_call.1} parent=1 // pred_fallthru
      _
    %257 = vsyncpa [#allocation4], 1

</llo_original>
